<compile_context>
chip_gen: v7x
topology: tpu7x:2x2x1
jax: 0.10.0
libtpu: 0.0.40
codegen_flags: <defaults>
</compile_context>

<pallas_src>
import functools
import math

import jax
import jax.numpy as jnp
import numpy as np
from jax import lax
from jax.experimental import pallas as pl
from jax.experimental.pallas import tpu as pltpu


def _pos_enc_kernel(coef_ref, o_ref, table_ref, *, fold: int):
    """Emits one (Bblk, tile_r, L) slab of the broadcast positional encoding.

    coef_ref  : (3, L) f32 per-lane constants [inv_freq, pos_offset+1, phase].
    o_ref     : output block, shape (Bblk, tile_r, L).
    table_ref : VMEM scratch, shape (tile_r, L), dtype == output dtype.
                Persists across the sequential batch-block axis, so the table
                is computed only once per row tile and merely copied out for
                every later batch block.

    Folded layout: lane c of (folded) row r holds the original
        position p = (row_tile*tile_r + r) * fold + (c // D)   (0-based)
        column   j = c % D
    All c-dependent terms live in coef_ref (host precomputed).
    """
    bblk = o_ref.shape[0]
    rows, lanes = table_ref.shape
    row_tile = pl.program_id(0)
    batch_blk = pl.program_id(1)

    @pl.when(batch_blk == 0)
    def _build_table():
        inv_freq = coef_ref[pl.ds(0, 1), :]   # (1, L) exp((j - j%2) * -ln(1e4)/D)
        pos_off = coef_ref[pl.ds(1, 1), :]    # (1, L) (c // D) + 1   (1-based)
        phase = coef_ref[pl.ds(2, 1), :]      # (1, L) (j % 2) * pi/2 (cos via sin)
        grow = (lax.broadcasted_iota(jnp.int32, (rows, lanes), 0)
                + row_tile * rows)
        # angle[r, c] = (p + 1) * inv_freq[c] + phase[c];
        # (p + 1) = grow*fold + pos_off is exact in f32 for positions < 2**24.
        angle = ((grow * fold).astype(jnp.float32) + pos_off) * inv_freq + phase
        table_ref[...] = jnp.sin(angle).astype(table_ref.dtype)

    # Every batch-block step (including the first) is pure table -> output
    # stores; Bblk is a small compile-time constant, so unroll.
    for b in range(bblk):
        o_ref[b] = table_ref[...].astype(o_ref.dtype)


def _divisor_at_most(n: int, cap: int) -> int:
    """Largest divisor of n that is <= cap (>= 1)."""
    cap = max(1, min(n, cap))
    for d in range(cap, 0, -1):
        if n % d == 0:
            return d
    return 1


def _choose_tile_rows(total_rows: int, per_row_bytes: int,
                      max_tile_bytes: int) -> int:
    """Rows per output block.

    Must be a multiple of 8 (or the full extent), fit the per-batch byte
    budget, and -- when possible -- leave >= 2 row tiles so the PARALLEL grid
    axis can be sharded across both v7x TensorCores.  Falls back to a
    non-divisor tile (Pallas masks the tail block) instead of the full extent,
    so awkward large shapes cannot blow past the VMEM budget.
    """
    max_rows = max(8, max_tile_bytes // max(1, per_row_bytes))
    divs = [t for t in range(8, min(max_rows, total_rows) + 1, 8)
            if total_rows % t == 0]
    multi = [t for t in divs if total_rows // t >= 2]
    if multi:
        return max(multi)              # biggest block that still gives >= 2 tiles
    if total_rows <= max_rows:
        return total_rows              # single full-extent tile
    if divs:
        return max(divs)
    return (max_rows // 8) * 8         # non-divisor tile; tail block is masked


def position_encoder_forward(batch_size: int, sent_len: int, d_embedding: int,
                             dtype=jnp.float32,
                             max_tile_bytes: int = 8 * 1024 * 1024,
                             max_batch_block: int = 64):
    """Pallas equivalent of PositionEncoder.forward(batch_size) -> (B, S, D).

    dtype=jnp.bfloat16 halves HBM traffic (this kernel is pure HBM-write
    bound); default f32 matches the torch module bit-for-bit semantics.
    """
    B, S, D = int(batch_size), int(sent_len), int(d_embedding)
    itemsize = np.dtype(dtype).itemsize

    # Lane-dense packing (generalized): pack `fold = 128 // gcd(D, 128)`
    # consecutive positions into one row of L = D*fold lanes (multiple of 128)
    # whenever fold divides S; covers D = 32, 64, 96, 192, ... .
    fold = 1
    f = 128 // math.gcd(D, 128)
    if f > 1 and S % f == 0:
        fold = f
    L = D * fold                  # lanes per (folded) output row
    R = S // fold                 # (folded) rows per batch element

    tile_r = _choose_tile_rows(R, L * itemsize, max_tile_bytes)
    num_row_tiles = pl.cdiv(R, tile_r)

    # Batch blocking: fold Bblk identical per-batch slabs into one contiguous
    # output block so small tables amortize per-grid-step overhead.
    per_tile_bytes = tile_r * L * itemsize
    bblk_cap = max(1, min(max_batch_block, max_tile_bytes // per_tile_bytes))
    Bblk = _divisor_at_most(B, bblk_cap)
    num_batch_blocks = B // Bblk

    # Host-precomputed per-lane coefficients (tiny, mirrors the torch math).
    c = np.arange(L, dtype=np.int64)
    j = c % D                                     # original embedding column
    q = c // D                                    # position offset inside a row
    inv_freq = np.exp((j - (j % 2)).astype(np.float32)
                      * (-math.log(10000.0) / D)).astype(np.float32)
    pos_off = (q + 1).astype(np.float32)          # 1-based positions
    phase = (j % 2).astype(np.float32) * np.float32(0.5 * math.pi)
    coef = jnp.asarray(np.stack([inv_freq, pos_off, phase], axis=0))  # (3, L)

    # VMEM budget: 2x double-buffered output block + scratch + coef + headroom.
    out_block_bytes = Bblk * per_tile_bytes
    scratch_bytes = tile_r * L * itemsize
    vmem_need = 2 * out_block_bytes + scratch_bytes + 2 * coef.size * 4
    vmem_limit = int(min(max(vmem_need + vmem_need // 4 + (2 << 20), 16 << 20),
                         48 << 20))

    kernel = functools.partial(_pos_enc_kernel, fold=fold)

    out = pl.pallas_call(
        kernel,
        out_shape=jax.ShapeDtypeStruct((B, R, L), dtype),
        # Row tiles outer (independent -> PARALLEL / megacore-shardable; each
        # core rebuilds its own scratch at its own batch_block==0 step), batch
        # blocks inner (reuse the scratch -> must stay sequential/ARBITRARY).
        grid=(num_row_tiles, num_batch_blocks),
        in_specs=[pl.BlockSpec((3, L), lambda r, b: (0, 0))],
        out_specs=pl.BlockSpec((Bblk, tile_r, L), lambda r, b: (b, r, 0)),
        scratch_shapes=[pltpu.VMEM((tile_r, L), dtype)],
        compiler_params=pltpu.CompilerParams(
            dimension_semantics=(pltpu.PARALLEL, pltpu.ARBITRARY),
            vmem_limit_bytes=vmem_limit,
        ),
    )(coef)
    # Undo the lane packing (row-major metadata reshape, outside the kernel).
    return out.reshape(B, S, D)


def _reference_numpy(batch_size: int, sent_len: int, d_embedding: int):
    position = np.arange(1, sent_len + 1, dtype=np.float32)[:, None]
    div_term = np.exp(
        np.arange(0, d_embedding, 2, dtype=np.float32)
        * (-math.log(10000.0) / d_embedding)
    )
    pe = np.zeros((sent_len, d_embedding), dtype=np.float32)
    pe[:, 0::2] = np.sin(position * div_term)
    if d_embedding % 2 == 0:
        pe[:, 1::2] = np.cos(position * div_term)
    else:
        pe[:, 1::2] = np.cos(position * div_term)[:, :-1]
    return np.broadcast_to(pe, (batch_size, sent_len, d_embedding)).copy()


if __name__ == "__main__":
    # forward(batch_size) takes no tensor inputs; key kept only for the
    # determinism convention.
    _ = jax.random.PRNGKey(0)

    def _check(batch_size, sent_len, d_embedding, dtype=jnp.float32,
               rtol=1e-5, atol=2e-5, **kw):
        out = position_encoder_forward(batch_size, sent_len, d_embedding,
                                       dtype=dtype, **kw)
        out = jax.block_until_ready(out)
        ref = _reference_numpy(batch_size, sent_len, d_embedding)
        np.testing.assert_allclose(np.asarray(out, dtype=np.float32), ref,
                                   rtol=rtol, atol=atol)

    _check(2, 8, 32)                                # lane-packed, single block
    _check(2, 16, 256)                              # D >= 128, two row tiles (v7x parallel axis)
    _check(3, 8, 33)                                # odd d_embedding (trimmed cos)
    _check(2, 64, 32, max_tile_bytes=4096)          # multi row-tile grid path
    _check(4, 8, 32, max_tile_bytes=2048)           # batch-blocked path (Bblk=2, 2 batch steps)
    _check(2, 40, 32, max_tile_bytes=4096)          # non-divisor row tile (masked tail block)
    _check(2, 16, 64, dtype=jnp.bfloat16,
           rtol=2e-2, atol=1e-2)                    # bf16 output / bf16 scratch path

    print("KERNEL_OK")
</pallas_src>

<mosaic_0001>
module attributes {stable_mosaic.version = 11 : i64} {
  func.func @_pos_enc_kernel(%arg0: i32, %arg1: i32, %arg2: memref<3x128xf32, #tpu.memory_space<vmem>>, %arg3: memref<2x2x128xf32, #tpu.memory_space<vmem>>, %arg4: memref<2x128xf32, #tpu.memory_space<vmem>>) attributes {dimension_semantics = [#tpu.dimension_semantics<parallel>, #tpu.dimension_semantics<arbitrary>], iteration_bounds = array<i64: 1, 1>, scalar_prefetch = 0 : i64, scratch_operands = 1 : i64, tpu.core_type = #tpu.core_type<tc>, window_params = [{pipeline_mode = #tpu.pipeline_mode<synchronous>, transform_indices = @transform_0, window_bounds = array<i64: 3, 128>}, {transform_indices = @transform_1, window_bounds = array<i64: 2, 2, 128>}]} {
    %c0_i32 = arith.constant 0 : i32
    %0 = arith.cmpi eq, %arg1, %c0_i32 : i32
    %1 = arith.extui %0 : i1 to i32
    %c0_i32_0 = arith.constant 0 : i32
    %2 = arith.cmpi ne, %1, %c0_i32_0 : i32
    scf.if %2 {
      %c0_9 = arith.constant 0 : index
      %c0_10 = arith.constant 0 : index
      %11 = vector.load %arg2[%c0_9, %c0_10] : memref<3x128xf32, #tpu.memory_space<vmem>>, vector<1x128xf32>
      %c1_11 = arith.constant 1 : index
      %c0_12 = arith.constant 0 : index
      %12 = vector.load %arg2[%c1_11, %c0_12] : memref<3x128xf32, #tpu.memory_space<vmem>>, vector<1x128xf32>
      %c2 = arith.constant 2 : index
      %c0_13 = arith.constant 0 : index
      %13 = vector.load %arg2[%c2, %c0_13] : memref<3x128xf32, #tpu.memory_space<vmem>>, vector<1x128xf32>
      %14 = tpu.iota {dimensions = array<i32: 0>} : vector<2x128xi32>
      %c2_i32 = arith.constant 2 : i32
      %15 = arith.muli %arg0, %c2_i32 : i32
      %16 = vector.broadcast %15 : i32 to vector<2x128xi32>
      %17 = arith.addi %14, %16 : vector<2x128xi32>
      %c4_i32 = arith.constant 4 : i32
      %18 = vector.broadcast %c4_i32 : i32 to vector<2x128xi32>
      %19 = arith.muli %17, %18 : vector<2x128xi32>
      %20 = arith.sitofp %19 : vector<2x128xi32> to vector<2x128xf32>
      %21 = vector.broadcast %12 : vector<1x128xf32> to vector<2x128xf32>
      %22 = arith.addf %20, %21 : vector<2x128xf32>
      %23 = vector.broadcast %11 : vector<1x128xf32> to vector<2x128xf32>
      %24 = arith.mulf %22, %23 : vector<2x128xf32>
      %25 = vector.broadcast %13 : vector<1x128xf32> to vector<2x128xf32>
      %26 = arith.addf %24, %25 : vector<2x128xf32>
      %27 = math.sin %26 : vector<2x128xf32>
      %c0_14 = arith.constant 0 : index
      %c0_15 = arith.constant 0 : index
      %28 = vector.load %arg4[%c0_14, %c0_15] : memref<2x128xf32, #tpu.memory_space<vmem>>, vector<2x128xf32>
      tpu.vector_store %arg4[%c0_14, %c0_15], %27 {strides = array<i32>} : memref<2x128xf32, #tpu.memory_space<vmem>>, vector<2x128xf32>,
    } else {
    }
    %c0 = arith.constant 0 : index
    %c0_1 = arith.constant 0 : index
    %3 = vector.load %arg4[%c0, %c0_1] : memref<2x128xf32, #tpu.memory_space<vmem>>, vector<2x128xf32>
    %c0_2 = arith.constant 0 : index
    %c0_3 = arith.constant 0 : index
    %c0_4 = arith.constant 0 : index
    %4 = vector.load %arg3[%c0_2, %c0_3, %c0_4] : memref<2x2x128xf32, #tpu.memory_space<vmem>>, vector<1x2x128xf32>
    %5 = vector.shape_cast %4 : vector<1x2x128xf32> to vector<2x128xf32>
    %6 = vector.shape_cast %3 : vector<2x128xf32> to vector<1x2x128xf32>
    tpu.vector_store %arg3[%c0_2, %c0_3, %c0_4], %6 {strides = array<i32>} : memref<2x2x128xf32, #tpu.memory_space<vmem>>, vector<1x2x128xf32>,
    %c0_5 = arith.constant 0 : index
    %c0_6 = arith.constant 0 : index
    %7 = vector.load %arg4[%c0_5, %c0_6] : memref<2x128xf32, #tpu.memory_space<vmem>>, vector<2x128xf32>
    %c1 = arith.constant 1 : index
    %c0_7 = arith.constant 0 : index
    %c0_8 = arith.constant 0 : index
    %8 = vector.load %arg3[%c1, %c0_7, %c0_8] : memref<2x2x128xf32, #tpu.memory_space<vmem>>, vector<1x2x128xf32>
    %9 = vector.shape_cast %8 : vector<1x2x128xf32> to vector<2x128xf32>
    %10 = vector.shape_cast %7 : vector<2x128xf32> to vector<1x2x128xf32>
    tpu.vector_store %arg3[%c1, %c0_7, %c0_8], %10 {strides = array<i32>} : memref<2x2x128xf32, #tpu.memory_space<vmem>>, vector<1x2x128xf32>,
    return
  }
  func.func @transform_0(%arg0: i32, %arg1: i32) -> (i32, i32) {
    %c0_i32 = arith.constant 0 : i32
    %c0_i32_0 = arith.constant 0 : i32
    %c0_i32_1 = arith.constant 0 : i32
    return %c0_i32, %c0_i32_0 : i32, i32
  }
  func.func @transform_1(%arg0: i32, %arg1: i32) -> (i32, i32, i32) {
    %c0_i32 = arith.constant 0 : i32
    %c0_i32_0 = arith.constant 0 : i32
    return %arg1, %arg0, %c0_i32 : i32, i32, i32
  }
}

</mosaic_0001>

<llo_original>
// kernel: tpu_custom_call.1
$region0: #{tpu_custom_call.1}
  #allocation0 [shape = 'u32[]', space=smem, size = 0x4, offset = 0x4, fixed_abs, tag = 'smem constant byte address 0x4 - core index']
  #allocation1 [shape = 'u32[144,128]{1,0:T(1,128)}', space=vmem, size = 0x12000, scoped, tag = 'internal scratch']
  #allocation2 [shape = 'f32[2,128]{1,0:T(2,128)}', space=vmem, size = 0x400, scoped, tag = 'scratch operand']
  %s0 = inlined_call_operand.hbm [shape: f32[3,128], index: 0, kind: input, shape index: {}]
  %s1 = inlined_call_operand.hbm [shape: f32[2,2,128], index: 1, kind: output, shape index: {}]
  %s2 = sld [smem:[#allocation0]]
  $region22: #{tpu_custom_call.1} parent=0
    _
  %s4 = ssub.s32 1, %s2
  %s5 = scalar_select 0, %s4, %s2
  $region1: #{tpu_custom_call.1} parent=0
    #allocation3 [shape = 'u8[2048]{0}', space=vmem, size = 0x800, scoped, tag = 'input window, operand 0, single buffered']
    #allocation4 [shape = 's32[1]{0}', space=sflag, size = 0x4, scoped, tag = 'scoped memory for tpu_custom_call.1']
    #allocation5 [shape = 's32[1]{0}', space=sflag, size = 0x4, scoped, tag = 'scoped memory for tpu_custom_call.1']
    #allocation6 [shape = 'u8[2048]{0}', space=vmem, size = 0x800, scoped, tag = 'output window, operand 0, single buffered']
    %6 = vsyncpa [#allocation4], 0
    %7 = vsyncpa [#allocation5], 0
    // Predicated region
    $region2: #{tpu_custom_call.1} parent=1 // pred_check
      _
    $region3: #{tpu_custom_call.1} parent=1 // pred_check_branch
      %9 = sbr.rel (0) target = $region5
    $region4: #{tpu_custom_call.1} parent=1 // pred_region
      %s11 = ssub.s32 64, 64
      %12 = vsyncadd [#allocation4], %s11
      %s14 = sshll.u32 [#allocation3], 4
      %s15 = int_to_ptr.vmem [resolvable:$true] %s14
      %17 = dma.hbm_to_vmem [thread:$0]  %s0, 64, %s15, [#allocation4]
    $region5: #{tpu_custom_call.1} parent=1 // pred_fallthru
      _
    // Predicated region
    $region6: #{tpu_custom_call.1} parent=1 // pred_check
      _
    $region7: #{tpu_custom_call.1} parent=1 // pred_check_branch
      %19 = sbr.rel (0) target = $region9
    $region8: #{tpu_custom_call.1} parent=1 // pred_region
      %20 = dma.done [#allocation4], 64
    $region9: #{tpu_custom_call.1} parent=1 // pred_fallthru
      _
    %p21 = scmp.eq.s32.totalorder 0, 0
    // Predicated region
    $region10: #{tpu_custom_call.1} parent=1 // pred_check
      %p22 = pneg %p21
    $region11: #{tpu_custom_call.1} parent=1 // pred_check_branch
      %24 = sbr.rel (%p22) target = $region13
    $region12: #{tpu_custom_call.1} parent=1 // pred_region
      %v25 = vld [vmem:[#allocation3] sm:$0x1]
      %v26 = vld [vmem:[#allocation3 + $0x1] sm:$0x1]
      %v27 = vld [vmem:[#allocation3 + $0x2] sm:$0x1]
      %v28 = vlaneseq
      %v29 = vshrl.u32 %v28, 7
      %s30 = smul.u32 0, 2
      %v31 = vstv %s30
      %v32 = vadd.s32 %v29, %v31
      %v33 = vmul.u32 %v32, 4
      %v34 = vcvt.s32.f32 %v33
      %v35 = vlaneseq
      %v36 = vshrl.u32 %v35, 7
      %v37 = vsub.s32 0, %v36
      %v38 = vrot.slane %v26, %v37
      %v39 = vadd.f32 %v34, %v38
      %v40 = vlaneseq
      %v41 = vshrl.u32 %v40, 7
      %v42 = vsub.s32 0, %v41
      %v43 = vrot.slane %v25, %v42
      %v44 = vmul.f32 %v39, %v43
      %v45 = vlaneseq
      %v46 = vshrl.u32 %v45, 7
      %v47 = vsub.s32 0, %v46
      %v48 = vrot.slane %v27, %v47
      %v49 = vadd.f32 %v44, %v48
      %v50 = vand.u32 2147483647, %v49
      %vm51 = vcmp.le.f32.partialorder %v50, 0.7853982
      %vm52 = vcmp.lt.s32.totalorder %v49, 0
      %v53 = vand.u32 %v49, 2139095040
      %v54 = vshrl.u32 %v53, 23
      %v55 = vsub.s32 %v54, 127
      %v56 = vand.u32 2147483647, %v49
      %v57 = vand.u32 %v56, 8388607
      %v58 = vor.u32 %v57, 8388608
      %v59 = vsub.s32 0, %v58
      %v60 = vadd.s32 %v55, 1
      %vm61 = vcmp.gt.s32.totalorder %v60, 0
      %v62 = vsel %vm61, %v60, 0
      %v63 = vshrl.u32 %v62, 5
      %v64 = vand.u32 %v62, 31
      %v65 = vsub.s32 32, %v64
      %v66 = vshrl.u32 683565275, %v65
      %v67 = vshll.u32 683565275, %v64
      %v68 = vshrl.u32 2475754826, %v65
      %v69 = vor.u32 %v67, %v68
      %v70 = vshll.u32 2475754826, %v64
      %v71 = vshrl.u32 2131351028, %v65
      %v72 = vor.u32 %v70, %v71
      %v73 = vshll.u32 2131351028, %v64
      %v74 = vshrl.u32 2102212464, %v65
      %v75 = vor.u32 %v73, %v74
      %v76 = vshll.u32 2102212464, %v64
      %v77 = vshrl.u32 920167782, %v65
      %v78 = vor.u32 %v76, %v77
      %v79 = vshll.u32 920167782, %v64
      %v80 = vshrl.u32 1326507024, %v65
      %v81 = vor.u32 %v79, %v80
      %vm82 = vcmp.lt.s32.totalorder %v63, 1
      %vm83 = vcmp.lt.s32.totalorder %v63, 2
      %vm84 = vcmp.lt.s32.totalorder %v63, 3
      %vm85 = vcmp.lt.s32.totalorder %v63, 4
      %v86 = vsel %vm82, %v66, %v69
      %v87 = vsel %vm85, %v75, 2102212464
      %v88 = vsel %vm84, %v72, %v87
      %v89 = vsel %vm83, %v86, %v88
      %v90 = vsel %vm82, %v69, %v72
      %v91 = vsel %vm85, %v78, 920167782
      %v92 = vsel %vm84, %v75, %v91
      %v93 = vsel %vm83, %v90, %v92
      %v94 = vsel %vm82, %v72, %v75
      %v95 = vsel %vm85, %v81, 1326507024
      %v96 = vsel %vm84, %v78, %v95
      %v97 = vsel %vm83, %v94, %v96
      %v98 = vshll.u32 %v58, 8
      %v99 = vmul.u32.u64.compose %v98, %v97
      %v100 = vextract.low.u32 %v99
      %v101 = vextract.high.u32 %v99
      %v102 = vmul.u32.u64.compose %v98, %v93
      %v103 = vextract.low.u32 %v102
      %v104 = vextract.high.u32 %v102
      %v105 = vmul.u32 %v98, %v89
      %v106 = vadd.s32 %v101, %v103
      %vm107 = vc.u32 %v101, %v103
      %v108 = vadd.s32 %v104, 1
      %v109 = vsel %vm107, %v108, %v104
      %v110 = vadd.s32 %v105, %v109
      %v111 = vadd.s32 %v110, 536870912
      %v112 = vshrl.u32 %v111, 30
      %v113 = vshll.u32 %v112, 30
      %v114 = vsub.s32 %v110, %v113
      %vm115 = vcmp.lt.s32.totalorder %v114, 0
      %v116 = vsub.s32 0, %v114
      %v117 = vsel %vm115, %v116, %v114
      %v118 = vclz %v117
      %v119 = vsub.s32 %v118, 2
      %vm120 = vcmp.gt.s32.totalorder 0, %v119
      %v121 = vsel %vm120, 0, %v119
      %v122 = vsub.s32 32, %v121
      %v123 = vshll.u32 %v114, %v121
      %v124 = vshrl.u32 %v106, %v122
      %v125 = vor.u32 %v123, %v124
      %v126 = vsub.s32 4294967266, %v121
      %v127 = vadd.s32 %v126, 127
      %v128 = vshll.u32 %v127, 23
      %v129 = vor.u32 4788187, %v128
      %v130 = vand.u32 2147483647, %v129
      %v132 = vcvt.s32.f32 %v125
      %v133 = vmul.f32 %v132, %v130
      %v134 = vxor.u32 %v133, 2147483648
      %v135 = vsel %vm52, %v134, %v133
      %v136 = vsub.s32 4, %v112
      %v137 = vsel %vm52, %v136, %v112
      %v138 = vsel %vm51, %v49, %v135
      %v139 = vsel %vm51, 0, %v137
      %v140 = vcosq.f32.pop %v138
      %v141 = vsinq.f32.pop %v138
      %vm142 = vweird.f32 %v49
      %v143 = vadd.s32 %v139, 3
      %v144 = vand.u32 %v143, 3
      %vm145 = vcmp.lt.s32.totalorder %v144, 2
      %vm146 = vcmp.eq.s32.totalorder %v144, 0
      %v147 = vxor.u32 %v141, 2147483648
      %v148 = vsel %vm146, %v140, %v147
      %vm149 = vcmp.eq.s32.totalorder %v144, 2
      %v150 = vxor.u32 %v140, 2147483648
      %v151 = vsel %vm149, %v150, %v141
      %v152 = vsel %vm145, %v148, %v151
      %v153 = vsel %vm142, nan, %v152
      %154 = vst [vmem:[#allocation2] sm:$0x3] %v153
    $region13: #{tpu_custom_call.1} parent=1 // pred_fallthru
      _
    %v155 = vld [vmem:[#allocation2] sm:$0x3]
    %156 = vst [vmem:[#allocation6] sm:$0x3] %v155
    %v157 = vld [vmem:[#allocation2] sm:$0x3]
    %s158 = scalar_lea.vmem [#allocation6], 2
    %159 = vst [vmem:[%s158] sm:$0x3] %v157
    // Predicated region
    $region14: #{tpu_custom_call.1} parent=1 // pred_check
      _
    $region15: #{tpu_custom_call.1} parent=1 // pred_check_branch
      %161 = sbr.rel (0) target = $region17
    $region16: #{tpu_custom_call.1} parent=1 // pred_region
      %s163 = ssub.s32 64, 64
      %164 = vsyncadd [#allocation5], %s163
      %s165 = sshll.u32 [#allocation6], 4
      %s166 = int_to_ptr.vmem [resolvable:$true] %s165
      %171 = dma.vmem_to_hbm [thread:$0]  %s166, 64, %s1, [#allocation5], 32, 32, 2
    $region17: #{tpu_custom_call.1} parent=1 // pred_fallthru
      _
    // Predicated region
    $region18: #{tpu_custom_call.1} parent=1 // pred_check
      _
    $region19: #{tpu_custom_call.1} parent=1 // pred_check_branch
      %173 = sbr.rel (0) target = $region21
    $region20: #{tpu_custom_call.1} parent=1 // pred_region
      %174 = dma.done [#allocation5], 64
    $region21: #{tpu_custom_call.1} parent=1 // pred_fallthru
      _
    %175 = vsyncpa [#allocation4], 1
    %176 = vsyncpa [#allocation5], 1

</llo_original>
